<compile_context>
chip_gen: v6e
topology: v6e:2x2x1
jax: 0.10.0
libtpu: 0.0.40
codegen_flags: <defaults>
</compile_context>

<pallas_src>
import jax
import jax.numpy as jnp
from jax.experimental import pallas as pl
from jax.experimental.pallas import tpu as pltpu

_MiB = 1024 * 1024


def _make_kernel(C):
    inv_c = float(1.0 / C)

    def kernel(x_ref, t_ref, o_ref):
        # x_ref, t_ref: (TILE_N, C, tile_hw) ; o_ref: (TILE_N, tile_hw) f32
        x = x_ref[...].astype(jnp.float32)
        t = t_ref[...].astype(jnp.float32)
        d = x - t
        # Sublane reduce over C -> XLU (different VLIW slot than the VALU
        # sub/mul), output tile is sublane/lane dense.
        o_ref[...] = jnp.sum(d * d, axis=1) * jnp.float32(inv_c)

    return kernel


def _vmem_capacity_bytes():
    try:
        return int(pltpu.get_tpu_info().vmem_capacity_bytes)
    except Exception:
        return 128 * _MiB  # conservative v5e/v6e default


def _round_up(x, m):
    return -(-x // m) * m


def _choose_tile_hw(tile_n, C, HW, in_dtype, tgt_dtype, budget_bytes):
    """Largest lane tile (multiple of 128, or full HW) such that the PADDED
    double-buffered footprint of both inputs plus the f32 output stays under
    `budget_bytes`.  Returns (tile_hw, footprint_bytes)."""

    def input_bytes_per_lane(dtype):
        itemsize = jnp.dtype(dtype).itemsize
        sublane_tile = max(8, 32 // itemsize)        # 8 f32 / 16 bf16 / 32 int8
        padded_c = _round_up(C, sublane_tile)
        return 2 * tile_n * padded_c * itemsize      # x2 pipeline buffers

    out_bytes_per_lane = 2 * _round_up(tile_n, 8) * 4  # f32 output, x2 buffers
    bytes_per_lane = (input_bytes_per_lane(in_dtype)
                      + input_bytes_per_lane(tgt_dtype)
                      + out_bytes_per_lane)

    max_tile = (budget_bytes // bytes_per_lane) // 128 * 128
    if max_tile < 128:
        max_tile = 128  # layout floor (huge C); may slightly exceed the budget

    if HW <= max_tile:
        tile_hw = HW                      # full extent: legal for any size
        padded_hw = _round_up(HW, 128)
    else:
        tile_hw = max_tile                # 128-multiple; ragged last block OK
        padded_hw = max_tile

    return tile_hw, bytes_per_lane * padded_hw


def mse_loss_xent(inputs, target):
    """Pallas equivalent of MSELoss_xent.forward.

    inputs: (N, C, H, W) float (any float dtype)
    target: (N, C, H, W) any dtype (cast to float32 in-kernel, like .float())
    returns: (N, H, W) float32 mse over the channel dim
    """
    assert inputs.shape[2:] == target.shape[2:], "predict & target shape do not match"
    N, C, H, W = inputs.shape
    HW = H * W

    # Free contiguous views; NO dtype cast here (cast happens inside the kernel).
    x = inputs.reshape(N, C, HW)
    t = target.reshape(N, C, HW)

    # Batch blocking: output block's sublane dim must be a multiple of 8 or the
    # full N extent.
    tile_n = N if N < 8 else 8

    cap = _vmem_capacity_bytes()
    budget = int(min(max(cap // 6, 8 * _MiB), 24 * _MiB))   # ~10 MiB v7x, ~21 MiB v5e/v6e
    tile_hw, footprint = _choose_tile_hw(tile_n, C, HW, inputs.dtype, target.dtype, budget)

    num_hw_tiles = pl.cdiv(HW, tile_hw)
    num_n_blocks = pl.cdiv(N, tile_n)

    vmem_limit = int(min(max(footprint + 8 * _MiB, 16 * _MiB), cap - 16 * _MiB))

    kernel = _make_kernel(C)

    out = pl.pallas_call(
        kernel,
        out_shape=jax.ShapeDtypeStruct((N, HW), jnp.float32),
        grid_spec=pltpu.PrefetchScalarGridSpec(
            num_scalar_prefetch=0,
            # HW-tile axis first: the large axis gets split across v7x's 2 TCs.
            grid=(num_hw_tiles, num_n_blocks),
            in_specs=[
                pl.BlockSpec((tile_n, C, tile_hw), lambda h, n: (n, 0, h)),
                pl.BlockSpec((tile_n, C, tile_hw), lambda h, n: (n, 0, h)),
            ],
            out_specs=pl.BlockSpec((tile_n, tile_hw), lambda h, n: (n, h)),
        ),
        compiler_params=pltpu.CompilerParams(
            dimension_semantics=("parallel", "parallel"),
            vmem_limit_bytes=vmem_limit,
        ),
    )(x, t)

    return out.reshape(N, H, W)


def _reference(inputs, target):
    target = target.astype(jnp.float32)
    inputs = inputs.astype(jnp.float32)
    return jnp.sum((inputs - target) ** 2, axis=1) / inputs.shape[1]


if __name__ == "__main__":
    key = jax.random.PRNGKey(0)
    k1, k2 = jax.random.split(key)

    N, C, H, W = 2, 4, 16, 16
    inputs = jax.random.normal(k1, (N, C, H, W), dtype=jnp.float32)
    target = jax.random.normal(k2, (N, C, H, W), dtype=jnp.float32)

    out = mse_loss_xent(inputs, target)
    out = jax.block_until_ready(out)

    ref = _reference(inputs, target)
    assert out.shape == (N, H, W)
    assert jnp.allclose(out, ref, atol=1e-5, rtol=1e-5)

    print("KERNEL_OK")
</pallas_src>

<mosaic_0001>
module attributes {stable_mosaic.version = 11 : i64} {
  func.func @kernel(%arg0: i32, %arg1: i32, %arg2: memref<2x4x256xf32, #tpu.memory_space<vmem>>, %arg3: memref<2x4x256xf32, #tpu.memory_space<vmem>>, %arg4: memref<2x256xf32, #tpu.memory_space<vmem>>) attributes {dimension_semantics = [#tpu.dimension_semantics<parallel>, #tpu.dimension_semantics<parallel>], iteration_bounds = array<i64: 1, 1>, scalar_prefetch = 0 : i64, scratch_operands = 0 : i64, tpu.core_type = #tpu.core_type<tc>, window_params = [{transform_indices = @transform_0, window_bounds = array<i64: 2, 4, 256>}, {transform_indices = @transform_1, window_bounds = array<i64: 2, 4, 256>}, {transform_indices = @transform_2, window_bounds = array<i64: 2, 256>}]} {
    %c0 = arith.constant 0 : index
    %c0_0 = arith.constant 0 : index
    %c0_1 = arith.constant 0 : index
    %0 = vector.load %arg2[%c0, %c0_0, %c0_1] : memref<2x4x256xf32, #tpu.memory_space<vmem>>, vector<2x4x256xf32>
    %c0_2 = arith.constant 0 : index
    %c0_3 = arith.constant 0 : index
    %c0_4 = arith.constant 0 : index
    %1 = vector.load %arg3[%c0_2, %c0_3, %c0_4] : memref<2x4x256xf32, #tpu.memory_space<vmem>>, vector<2x4x256xf32>
    %2 = arith.subf %0, %1 : vector<2x4x256xf32>
    %3 = arith.mulf %2, %2 : vector<2x4x256xf32>
    %cst = arith.constant dense<0.000000e+00> : vector<2x256xf32>
    %4 = vector.multi_reduction <add>, %3, %cst [1] : vector<2x4x256xf32> to vector<2x256xf32>
    %cst_5 = arith.constant 2.500000e-01 : f32
    %5 = vector.broadcast %cst_5 : f32 to vector<2x256xf32>
    %6 = arith.mulf %4, %5 : vector<2x256xf32>
    %c0_6 = arith.constant 0 : index
    %c0_7 = arith.constant 0 : index
    %7 = vector.load %arg4[%c0_6, %c0_7] : memref<2x256xf32, #tpu.memory_space<vmem>>, vector<2x256xf32>
    tpu.vector_store %arg4[%c0_6, %c0_7], %6 {strides = array<i32>} : memref<2x256xf32, #tpu.memory_space<vmem>>, vector<2x256xf32>,
    return
  }
  func.func @transform_0(%arg0: i32, %arg1: i32) -> (i32, i32, i32) {
    %c0_i32 = arith.constant 0 : i32
    %c0_i32_0 = arith.constant 0 : i32
    return %arg1, %c0_i32, %arg0 : i32, i32, i32
  }
  func.func @transform_1(%arg0: i32, %arg1: i32) -> (i32, i32, i32) {
    %c0_i32 = arith.constant 0 : i32
    %c0_i32_0 = arith.constant 0 : i32
    return %arg1, %c0_i32, %arg0 : i32, i32, i32
  }
  func.func @transform_2(%arg0: i32, %arg1: i32) -> (i32, i32) {
    %c0_i32 = arith.constant 0 : i32
    return %arg1, %arg0 : i32, i32
  }
}

</mosaic_0001>

<llo_original>
// kernel: tpu_custom_call.1
$region0: #{tpu_custom_call.1}
  #allocation0 [shape = 'u32[]', space=smem, size = 0x4, offset = 0x4, fixed_abs, tag = 'smem constant byte address 0x4 - core index']
  #allocation1 [shape = 'u32[144,128]{1,0:T(1,128)}', space=vmem, size = 0x12000, scoped, tag = 'internal scratch']
  %s0 = inlined_call_operand.hbm [shape: f32[2,4,256], index: 0, kind: input, shape index: {}]
  %s1 = inlined_call_operand.hbm [shape: f32[2,4,256], index: 1, kind: input, shape index: {}]
  %s2 = inlined_call_operand.hbm [shape: f32[2,256], index: 2, kind: output, shape index: {}]
  %s3 = sld [smem:[#allocation0]]
  $region26: #{tpu_custom_call.1} parent=0
    _
  %s5 = ssub.s32 1, %s3
  %s6 = scalar_select 0, %s5, %s3
  $region1: #{tpu_custom_call.1} parent=0
    #allocation2 [shape = 'u8[8192]{0}', space=vmem, size = 0x2000, scoped, tag = 'input window, operand 0, single buffered']
    #allocation3 [shape = 's32[1]{0}', space=sflag, size = 0x4, scoped, tag = 'scoped memory for tpu_custom_call.1']
    #allocation4 [shape = 's32[1]{0}', space=sflag, size = 0x4, scoped, tag = 'scoped memory for tpu_custom_call.1']
    #allocation5 [shape = 'u8[8192]{0}', space=vmem, size = 0x2000, scoped, tag = 'input window, operand 1, single buffered']
    #allocation6 [shape = 's32[1]{0}', space=sflag, size = 0x4, scoped, tag = 'scoped memory for tpu_custom_call.1']
    #allocation7 [shape = 'u8[2048]{0}', space=vmem, size = 0x800, scoped, tag = 'output window, operand 0, single buffered']
    %7 = vsyncpa [#allocation3], 0
    %8 = vsyncpa [#allocation6], 0
    %9 = vsyncpa [#allocation4], 0
    // Predicated region
    $region2: #{tpu_custom_call.1} parent=1 // pred_check
      _
    $region3: #{tpu_custom_call.1} parent=1 // pred_check_branch
      %11 = sbr.rel (0) target = $region5
    $region4: #{tpu_custom_call.1} parent=1 // pred_region
      %s13 = ssub.s32 256, 256
      %14 = vsyncadd [#allocation3], %s13
      %s15 = sshll.u32 [#allocation2], 4
      %s16 = int_to_ptr.vmem [resolvable:$true] %s15
      %21 = dma.hbm_to_vmem [thread:$0]  %s0, 256, %s16, [#allocation3], 128, 128, 8
    $region5: #{tpu_custom_call.1} parent=1 // pred_fallthru
      _
    // Predicated region
    $region6: #{tpu_custom_call.1} parent=1 // pred_check
      _
    $region7: #{tpu_custom_call.1} parent=1 // pred_check_branch
      %23 = sbr.rel (0) target = $region9
    $region8: #{tpu_custom_call.1} parent=1 // pred_region
      %s25 = ssub.s32 256, 256
      %26 = vsyncadd [#allocation6], %s25
      %s27 = sshll.u32 [#allocation5], 4
      %s28 = int_to_ptr.vmem [resolvable:$true] %s27
      %33 = dma.hbm_to_vmem [thread:$0]  %s1, 256, %s28, [#allocation6], 128, 128, 8
    $region9: #{tpu_custom_call.1} parent=1 // pred_fallthru
      _
    // Predicated region
    $region10: #{tpu_custom_call.1} parent=1 // pred_check
      _
    $region11: #{tpu_custom_call.1} parent=1 // pred_check_branch
      %35 = sbr.rel (0) target = $region13
    $region12: #{tpu_custom_call.1} parent=1 // pred_region
      %36 = dma.done [#allocation3], 256
    $region13: #{tpu_custom_call.1} parent=1 // pred_fallthru
      _
    // Predicated region
    $region14: #{tpu_custom_call.1} parent=1 // pred_check
      _
    $region15: #{tpu_custom_call.1} parent=1 // pred_check_branch
      %38 = sbr.rel (0) target = $region17
    $region16: #{tpu_custom_call.1} parent=1 // pred_region
      %39 = dma.done [#allocation6], 256
    $region17: #{tpu_custom_call.1} parent=1 // pred_fallthru
      _
    %v40 = vld [vmem:[#allocation2] sm:$0xff]
    %v41 = vld [vmem:[#allocation2 + $0x8] sm:$0xff]
    %v42 = vld [vmem:[#allocation5] sm:$0xff]
    %v43 = vld [vmem:[#allocation5 + $0x8] sm:$0xff]
    %v44 = vsub.f32 %v40, %v42
    %v45 = vsub.f32 %v41, %v43
    %v46 = vmul.f32 %v44, %v44
    %v47 = vmul.f32 %v45, %v45
    %v50 = vcombine.high %v46, %v46
    %v51 = vcombine.high %v47, %v47
    %vm54 = vcmask 1043456
    %v55 = vsel %vm54, %v46, 0.0
    %v56 = vrot.slane %v55, 4
    %v57 = vadd.f32 %v55, %v56
    %v58 = vrot.slane %v57, 2
    %v59 = vadd.f32 %v57, %v58
    %v60 = vrot.slane %v59, 1
    %v61 = vadd.f32 %v59, %v60
    %v62 = vsel %vm54, %v50, 0.0
    %v63 = vrot.slane %v62, 4
    %v64 = vadd.f32 %v62, %v63
    %v65 = vrot.slane %v64, 2
    %v66 = vadd.f32 %v64, %v65
    %v67 = vrot.slane %v66, 1
    %v68 = vadd.f32 %v66, %v67
    %v69 = vsel %vm54, %v47, 0.0
    %v70 = vrot.slane %v69, 4
    %v71 = vadd.f32 %v69, %v70
    %v72 = vrot.slane %v71, 2
    %v73 = vadd.f32 %v71, %v72
    %v74 = vrot.slane %v73, 1
    %v75 = vadd.f32 %v73, %v74
    %v76 = vsel %vm54, %v51, 0.0
    %v77 = vrot.slane %v76, 4
    %v78 = vadd.f32 %v76, %v77
    %v79 = vrot.slane %v78, 2
    %v80 = vadd.f32 %v78, %v79
    %v81 = vrot.slane %v80, 1
    %v82 = vadd.f32 %v80, %v81
    %v83 = vmul.f32 %v61, 0.25
    %v84 = vmul.f32 %v68, 0.25
    %v85 = vmul.f32 %v75, 0.25
    %v86 = vmul.f32 %v82, 0.25
    %v91 = vcombine.low %v83, %v84
    %v93 = vunpack.c.l.s4 1983009808
    %v94 = vunpack.c.0.s8 %v93
    %v95 = vlaneseq
    %v96 = vshrl.u32 %v95, 7
    %v97 = vsub.s32 %v94, %v96
    %v98 = vrot.slane %v91, %v97
    %v99 = vcombine.low %v85, %v86
    %v101 = vunpack.c.l.s4 1983009808
    %v102 = vunpack.c.0.s8 %v101
    %v103 = vlaneseq
    %v104 = vshrl.u32 %v103, 7
    %v105 = vsub.s32 %v102, %v104
    %v106 = vrot.slane %v99, %v105
    %vm107 = vcmask 1044484
    %v108 = vsel %vm107, %v98, %v98
    %vm109 = vcmask 1046534
    %v110 = vsel %vm109, %v98, %v108
    %v111 = vrot.slane %v106, 7
    %vm112 = vcmask 1041409
    %v113 = vsel %vm112, %v111, %v110
    %vm114 = vcmask 1043459
    %v115 = vsel %vm114, %v111, %v113
    %vm116 = vcmask 1045509
    %v117 = vsel %vm116, %v111, %v115
    %vm118 = vcmask 1047559
    %v119 = vsel %vm118, %v111, %v117
    %121 = vst [vmem:[#allocation7] sm:$0xf] %v119
    // Predicated region
    $region18: #{tpu_custom_call.1} parent=1 // pred_check
      _
    $region19: #{tpu_custom_call.1} parent=1 // pred_check_branch
      %123 = sbr.rel (0) target = $region21
    $region20: #{tpu_custom_call.1} parent=1 // pred_region
      %s125 = ssub.s32 64, 64
      %126 = vsyncadd [#allocation4], %s125
      %s128 = sshll.u32 [#allocation7], 4
      %s129 = int_to_ptr.vmem [resolvable:$true] %s128
      %131 = dma.vmem_to_hbm [thread:$0]  %s129, 64, %s2, [#allocation4]
    $region21: #{tpu_custom_call.1} parent=1 // pred_fallthru
      _
    // Predicated region
    $region22: #{tpu_custom_call.1} parent=1 // pred_check
      _
    $region23: #{tpu_custom_call.1} parent=1 // pred_check_branch
      %133 = sbr.rel (0) target = $region25
    $region24: #{tpu_custom_call.1} parent=1 // pred_region
      %134 = dma.done [#allocation4], 64
    $region25: #{tpu_custom_call.1} parent=1 // pred_fallthru
      _
    %135 = vsyncpa [#allocation3], 1
    %136 = vsyncpa [#allocation6], 1
    %137 = vsyncpa [#allocation4], 1

</llo_original>
